<compile_context>
chip_gen: v5e
topology: v5e:2x2
jax: 0.10.0
libtpu: 0.0.40
codegen_flags: <defaults>
</compile_context>

<pallas_src>
import jax
import jax.numpy as jnp
from jax.experimental import pallas as pl
from jax.experimental.pallas import tpu as pltpu

BN_EPS = 1e-5
MXU_DTYPE = jnp.bfloat16   # matmul-operand dtype; accumulation is always f32


# ----------------------------------------------------------------------------
# im2col (wrapper glue): TRANSPOSED patch matrix [K, B*Ho*Wo] so the in-kernel
# conv matmul output is lane-dense ([C, B*Ho*Wo]).
# TODO(synk): at larger B/H/W, stream the im2col per output tile via a
# BlockSpec index_map instead of materializing [K, B*Ho*Wo] in HBM; at the
# current ~20 KB size it is fine as (XLA-fused) wrapper glue.
# ----------------------------------------------------------------------------
def _im2col_transposed(x, kh, kw, stride, pad):
    B, C, H, W = x.shape
    xp = jnp.pad(x, ((0, 0), (0, 0), (pad, pad), (pad, pad)))
    Ho = (H + 2 * pad - kh) // stride + 1
    Wo = (W + 2 * pad - kw) // stride + 1
    cols = []
    for i in range(kh):
        for j in range(kw):
            cols.append(
                xp[:, :, i : i + stride * Ho : stride, j : j + stride * Wo : stride]
            )
    pat = jnp.stack(cols, axis=2)                 # [B, C, kh*kw, Ho, Wo]
    # rows ordered (c, i, j) to match w.reshape(Cout, Cin*kh*kw);
    # cols ordered (b, ho, wo) to match the NCHW flatten downstream.
    patT = pat.transpose(1, 2, 0, 3, 4).reshape(C * kh * kw, B * Ho * Wo)
    return patT, Ho, Wo


# ----------------------------------------------------------------------------
# Fused kernel: conv (lane-dense matmul) -> flatten folded into Linear1 ->
# BN -> ReLU -> Linear2 -> BN -> ReLU -> Linear3 + bias.  Everything stays in
# vregs; there is no VMEM scratch.
# ----------------------------------------------------------------------------
def _bn_relu(h, gamma, beta):
    # BatchNorm1d train mode: batch statistics, biased variance, eps in rsqrt.
    mu = jnp.mean(h, axis=0, keepdims=True)
    var = jnp.mean(jnp.square(h - mu), axis=0, keepdims=True)
    scale = gamma * jax.lax.rsqrt(var + BN_EPS)          # rsqrt -> EUP slot
    shift = beta - mu * scale
    return jnp.maximum(h * scale + shift, 0.0)


def _fused_kernel(patT_ref, wc_ref, bc_ref,
                  w1r_ref, g1_ref, bt1_ref,
                  w2_ref, g2_ref, bt2_ref,
                  w3_ref, b3_ref,
                  o_ref):
    B = o_ref.shape[0]
    C, S, N1 = w1r_ref.shape

    # Backbone conv: one lane-dense MXU matmul [C, Kp] @ [Kp, B*S] -> [C, B*S]
    # (bf16 operands, f32 accumulation), plus bias broadcast over lanes.
    convT = jnp.dot(wc_ref[...], patT_ref[...],
                    preferred_element_type=jnp.float32) + bc_ref[...]

    # First linear with the NCHW flatten folded in:
    #     h[b, n] = sum_{c,s} convT[c, b*S + s] * w1r[c, s, n]
    # Per-batch lane slices of convT (at most one XLU roll each), then one
    # [B, S] @ [S, N1] MXU matmul per channel accumulated into an f32 vreg
    # accumulator.  No scratch, no masked stores, no lane-crossing reshape.
    cs = [convT[:, b * S:(b + 1) * S] for b in range(B)]      # B x [C, S]
    row_ids = jax.lax.broadcasted_iota(jnp.int32, (B, S), 0)  # sublane ids
    h = jnp.zeros((B, N1), jnp.float32)
    for c in range(C):
        # Assemble the [B, S] LHS for channel c from the per-batch rows via
        # cheap sublane broadcast + select (no concatenate / reshape needed).
        lhs = jnp.broadcast_to(cs[0][c:c + 1, :], (B, S))
        for b in range(1, B):
            lhs = jnp.where(row_ids == b,
                            jnp.broadcast_to(cs[b][c:c + 1, :], (B, S)), lhs)
        h = h + jnp.dot(lhs.astype(w1r_ref.dtype), w1r_ref[c],
                        preferred_element_type=jnp.float32)

    # Remaining projection head (intermediates stay in vregs; BN/ReLU in f32).
    h = _bn_relu(h, g1_ref[...], bt1_ref[...])
    h = jnp.dot(h.astype(w2_ref.dtype), w2_ref[...],
                preferred_element_type=jnp.float32)
    h = _bn_relu(h, g2_ref[...], bt2_ref[...])
    o_ref[...] = jnp.dot(h.astype(w3_ref.dtype), w3_ref[...],
                         preferred_element_type=jnp.float32) + b3_ref[...]


def barlowtwins_forward(x, params):
    w = params["conv_w"]
    Cout, Cin, kh, kw = w.shape
    B = x.shape[0]

    patT, Ho, Wo = _im2col_transposed(x, kh, kw, stride=2, pad=1)
    S = Ho * Wo
    K = Cin * kh * kw
    Kp = ((K + 7) // 8) * 8                       # pad ragged K (36 -> 40)
    patT = jnp.pad(patT, ((0, Kp - K), (0, 0)))
    wc = jnp.pad(w.reshape(Cout, K), ((0, 0), (0, Kp - K)))
    bc = params["conv_b"].reshape(Cout, 1)

    N1 = params["w1"].shape[1]
    out_dim = params["w3"].shape[1]
    assert params["w1"].shape[0] == Cout * S
    # Fold flatten(start_dim=1) into the first linear: free host-side reshape.
    w1r = params["w1"].reshape(Cout, S, N1)

    mx = MXU_DTYPE
    args = (
        patT.astype(mx), wc.astype(mx), bc,
        w1r.astype(mx), params["g1"], params["bt1"],
        params["w2"].astype(mx), params["g2"], params["bt2"],
        params["w3"].astype(mx), params["b3"],
    )

    # TODO(synk): at realistic BarlowTwins sizes (input 2048, hidden/out 8192)
    # these whole-array VMEM blocks must become an (M, N, K)-tiled grid with an
    # f32 VMEM accumulator + pl.when init/finalize, bf16 weights, an explicit
    # pltpu.CompilerParams(vmem_limit_bytes=..., dimension_semantics=
    # ("parallel","parallel","arbitrary")), and per-generation tile sizes
    # (v7x has only 64 MiB VMEM vs 128 MiB on v5e/v6e).
    return pl.pallas_call(
        _fused_kernel,
        out_shape=jax.ShapeDtypeStruct((B, out_dim), jnp.float32),
        in_specs=[
            pl.BlockSpec(memory_space=pltpu.MemorySpace.VMEM) for _ in args
        ],
        out_specs=pl.BlockSpec(memory_space=pltpu.MemorySpace.VMEM),
    )(*args)


# ----------------------------------------------------------------------------
# Deterministic parameter construction (unchanged shapes / semantics)
# ----------------------------------------------------------------------------
def make_params(key, c_in=4, c_out=8, input_dim=512, hidden_dim=128, output_dim=128):
    ks = jax.random.split(key, 6)
    return {
        # backbone conv (PyTorch weight layout [Cout, Cin, kh, kw])
        "conv_w": 0.1 * jax.random.normal(ks[0], (c_out, c_in, 3, 3), jnp.float32),
        "conv_b": 0.01 * jax.random.normal(ks[1], (c_out,), jnp.float32),
        # projection head; weights stored transposed ([in, out]) for x @ W
        "w1": 0.05 * jax.random.normal(ks[2], (input_dim, hidden_dim), jnp.float32),
        "g1": jnp.ones((1, hidden_dim), jnp.float32),
        "bt1": jnp.zeros((1, hidden_dim), jnp.float32),
        "w2": 0.05 * jax.random.normal(ks[3], (hidden_dim, hidden_dim), jnp.float32),
        "g2": jnp.ones((1, hidden_dim), jnp.float32),
        "bt2": jnp.zeros((1, hidden_dim), jnp.float32),
        "w3": 0.05 * jax.random.normal(ks[4], (hidden_dim, output_dim), jnp.float32),
        "b3": 0.01 * jax.random.normal(ks[5], (1, output_dim), jnp.float32),
    }


if __name__ == "__main__":
    key = jax.random.PRNGKey(0)
    kx, kp = jax.random.split(key)

    # small shapes: B=2, C=4, H=W=16 -> backbone features 8*8*8 = 512
    # head_size = [512, 128, 128]
    x = jax.random.normal(kx, (2, 4, 16, 16), jnp.float32)
    params = make_params(kp)

    z = jax.jit(barlowtwins_forward)(x, params)
    jax.block_until_ready(z)
    assert z.shape == (2, 128) and z.dtype == jnp.float32
    print("KERNEL_OK")
</pallas_src>

<mosaic_0001>
module attributes {stable_mosaic.version = 11 : i64} {
  func.func @_fused_kernel(%arg0: memref<40x128xbf16, #tpu.memory_space<vmem>>, %arg1: memref<8x40xbf16, #tpu.memory_space<vmem>>, %arg2: memref<8x1xf32, #tpu.memory_space<vmem>>, %arg3: memref<8x64x128xbf16, #tpu.memory_space<vmem>>, %arg4: memref<1x128xf32, #tpu.memory_space<vmem>>, %arg5: memref<1x128xf32, #tpu.memory_space<vmem>>, %arg6: memref<128x128xbf16, #tpu.memory_space<vmem>>, %arg7: memref<1x128xf32, #tpu.memory_space<vmem>>, %arg8: memref<1x128xf32, #tpu.memory_space<vmem>>, %arg9: memref<128x128xbf16, #tpu.memory_space<vmem>>, %arg10: memref<1x128xf32, #tpu.memory_space<vmem>>, %arg11: memref<2x128xf32, #tpu.memory_space<vmem>>) attributes {dimension_semantics = [], scalar_prefetch = 0 : i64, scratch_operands = 0 : i64, tpu.core_type = #tpu.core_type<tc>} {
    %c0 = arith.constant 0 : index
    %c0_0 = arith.constant 0 : index
    %0 = vector.load %arg1[%c0, %c0_0] : memref<8x40xbf16, #tpu.memory_space<vmem>>, vector<8x40xbf16>
    %c0_1 = arith.constant 0 : index
    %c0_2 = arith.constant 0 : index
    %1 = vector.load %arg0[%c0_1, %c0_2] : memref<40x128xbf16, #tpu.memory_space<vmem>>, vector<40x128xbf16>
    %cst = arith.constant dense<0.000000e+00> : vector<8x128xf32>
    %2 = tpu.matmul %0, %1, %cst {dimension_numbers = #tpu.dot_dimension_numbers<[1], [0], [0], [1], [0, 0, 1, 1], [], []>} : vector<8x40xbf16>, vector<40x128xbf16>, vector<8x128xf32> -> vector<8x128xf32>
    %c0_3 = arith.constant 0 : index
    %c0_4 = arith.constant 0 : index
    %3 = vector.load %arg2[%c0_3, %c0_4] : memref<8x1xf32, #tpu.memory_space<vmem>>, vector<8x1xf32>
    %4 = vector.broadcast %3 : vector<8x1xf32> to vector<8x128xf32>
    %5 = arith.addf %2, %4 : vector<8x128xf32>
    %6 = vector.extract_strided_slice %5 {offsets = [0, 0], sizes = [8, 64], strides = [1, 1]} : vector<8x128xf32> to vector<8x64xf32>
    %7 = vector.extract_strided_slice %5 {offsets = [0, 64], sizes = [8, 64], strides = [1, 1]} : vector<8x128xf32> to vector<8x64xf32>
    %8 = tpu.iota {dimensions = array<i32: 0>} : vector<2x64xi32>
    %cst_5 = arith.constant 0.000000e+00 : f32
    %9 = vector.broadcast %cst_5 : f32 to vector<2x128xf32>
    %10 = vector.extract_strided_slice %6 {offsets = [0, 0], sizes = [1, 64], strides = [1, 1]} : vector<8x64xf32> to vector<1x64xf32>
    %11 = vector.shape_cast %10 : vector<1x64xf32> to vector<1x64xf32>
    %12 = vector.broadcast %11 : vector<1x64xf32> to vector<2x64xf32>
    %c1_i32 = arith.constant 1 : i32
    %13 = vector.broadcast %c1_i32 : i32 to vector<2x64xi32>
    %14 = arith.cmpi eq, %8, %13 : vector<2x64xi32>
    %15 = vector.extract_strided_slice %7 {offsets = [0, 0], sizes = [1, 64], strides = [1, 1]} : vector<8x64xf32> to vector<1x64xf32>
    %16 = vector.shape_cast %15 : vector<1x64xf32> to vector<1x64xf32>
    %17 = vector.broadcast %16 : vector<1x64xf32> to vector<2x64xf32>
    %18 = arith.select %14, %17, %12 : vector<2x64xi1>, vector<2x64xf32>
    %19 = arith.truncf %18 : vector<2x64xf32> to vector<2x64xbf16>
    %c0_6 = arith.constant 0 : index
    %c0_7 = arith.constant 0 : index
    %c0_8 = arith.constant 0 : index
    %20 = vector.load %arg3[%c0_6, %c0_7, %c0_8] : memref<8x64x128xbf16, #tpu.memory_space<vmem>>, vector<1x64x128xbf16>
    %21 = vector.shape_cast %20 : vector<1x64x128xbf16> to vector<64x128xbf16>
    %cst_9 = arith.constant dense<0.000000e+00> : vector<2x128xf32>
    %22 = tpu.matmul %19, %21, %cst_9 {dimension_numbers = #tpu.dot_dimension_numbers<[1], [0], [0], [1], [0, 0, 1, 1], [], []>} : vector<2x64xbf16>, vector<64x128xbf16>, vector<2x128xf32> -> vector<2x128xf32>
    %23 = arith.addf %9, %22 : vector<2x128xf32>
    %24 = vector.extract_strided_slice %6 {offsets = [1, 0], sizes = [1, 64], strides = [1, 1]} : vector<8x64xf32> to vector<1x64xf32>
    %25 = vector.shape_cast %24 : vector<1x64xf32> to vector<1x64xf32>
    %26 = vector.broadcast %25 : vector<1x64xf32> to vector<2x64xf32>
    %c1_i32_10 = arith.constant 1 : i32
    %27 = vector.broadcast %c1_i32_10 : i32 to vector<2x64xi32>
    %28 = arith.cmpi eq, %8, %27 : vector<2x64xi32>
    %29 = vector.extract_strided_slice %7 {offsets = [1, 0], sizes = [1, 64], strides = [1, 1]} : vector<8x64xf32> to vector<1x64xf32>
    %30 = vector.shape_cast %29 : vector<1x64xf32> to vector<1x64xf32>
    %31 = vector.broadcast %30 : vector<1x64xf32> to vector<2x64xf32>
    %32 = arith.select %28, %31, %26 : vector<2x64xi1>, vector<2x64xf32>
    %33 = arith.truncf %32 : vector<2x64xf32> to vector<2x64xbf16>
    %c1 = arith.constant 1 : index
    %c0_11 = arith.constant 0 : index
    %c0_12 = arith.constant 0 : index
    %34 = vector.load %arg3[%c1, %c0_11, %c0_12] : memref<8x64x128xbf16, #tpu.memory_space<vmem>>, vector<1x64x128xbf16>
    %35 = vector.shape_cast %34 : vector<1x64x128xbf16> to vector<64x128xbf16>
    %cst_13 = arith.constant dense<0.000000e+00> : vector<2x128xf32>
    %36 = tpu.matmul %33, %35, %cst_13 {dimension_numbers = #tpu.dot_dimension_numbers<[1], [0], [0], [1], [0, 0, 1, 1], [], []>} : vector<2x64xbf16>, vector<64x128xbf16>, vector<2x128xf32> -> vector<2x128xf32>
    %37 = arith.addf %23, %36 : vector<2x128xf32>
    %38 = vector.extract_strided_slice %6 {offsets = [2, 0], sizes = [1, 64], strides = [1, 1]} : vector<8x64xf32> to vector<1x64xf32>
    %39 = vector.shape_cast %38 : vector<1x64xf32> to vector<1x64xf32>
    %40 = vector.broadcast %39 : vector<1x64xf32> to vector<2x64xf32>
    %c1_i32_14 = arith.constant 1 : i32
    %41 = vector.broadcast %c1_i32_14 : i32 to vector<2x64xi32>
    %42 = arith.cmpi eq, %8, %41 : vector<2x64xi32>
    %43 = vector.extract_strided_slice %7 {offsets = [2, 0], sizes = [1, 64], strides = [1, 1]} : vector<8x64xf32> to vector<1x64xf32>
    %44 = vector.shape_cast %43 : vector<1x64xf32> to vector<1x64xf32>
    %45 = vector.broadcast %44 : vector<1x64xf32> to vector<2x64xf32>
    %46 = arith.select %42, %45, %40 : vector<2x64xi1>, vector<2x64xf32>
    %47 = arith.truncf %46 : vector<2x64xf32> to vector<2x64xbf16>
    %c2 = arith.constant 2 : index
    %c0_15 = arith.constant 0 : index
    %c0_16 = arith.constant 0 : index
    %48 = vector.load %arg3[%c2, %c0_15, %c0_16] : memref<8x64x128xbf16, #tpu.memory_space<vmem>>, vector<1x64x128xbf16>
    %49 = vector.shape_cast %48 : vector<1x64x128xbf16> to vector<64x128xbf16>
    %cst_17 = arith.constant dense<0.000000e+00> : vector<2x128xf32>
    %50 = tpu.matmul %47, %49, %cst_17 {dimension_numbers = #tpu.dot_dimension_numbers<[1], [0], [0], [1], [0, 0, 1, 1], [], []>} : vector<2x64xbf16>, vector<64x128xbf16>, vector<2x128xf32> -> vector<2x128xf32>
    %51 = arith.addf %37, %50 : vector<2x128xf32>
    %52 = vector.extract_strided_slice %6 {offsets = [3, 0], sizes = [1, 64], strides = [1, 1]} : vector<8x64xf32> to vector<1x64xf32>
    %53 = vector.shape_cast %52 : vector<1x64xf32> to vector<1x64xf32>
    %54 = vector.broadcast %53 : vector<1x64xf32> to vector<2x64xf32>
    %c1_i32_18 = arith.constant 1 : i32
    %55 = vector.broadcast %c1_i32_18 : i32 to vector<2x64xi32>
    %56 = arith.cmpi eq, %8, %55 : vector<2x64xi32>
    %57 = vector.extract_strided_slice %7 {offsets = [3, 0], sizes = [1, 64], strides = [1, 1]} : vector<8x64xf32> to vector<1x64xf32>
    %58 = vector.shape_cast %57 : vector<1x64xf32> to vector<1x64xf32>
    %59 = vector.broadcast %58 : vector<1x64xf32> to vector<2x64xf32>
    %60 = arith.select %56, %59, %54 : vector<2x64xi1>, vector<2x64xf32>
    %61 = arith.truncf %60 : vector<2x64xf32> to vector<2x64xbf16>
    %c3 = arith.constant 3 : index
    %c0_19 = arith.constant 0 : index
    %c0_20 = arith.constant 0 : index
    %62 = vector.load %arg3[%c3, %c0_19, %c0_20] : memref<8x64x128xbf16, #tpu.memory_space<vmem>>, vector<1x64x128xbf16>
    %63 = vector.shape_cast %62 : vector<1x64x128xbf16> to vector<64x128xbf16>
    %cst_21 = arith.constant dense<0.000000e+00> : vector<2x128xf32>
    %64 = tpu.matmul %61, %63, %cst_21 {dimension_numbers = #tpu.dot_dimension_numbers<[1], [0], [0], [1], [0, 0, 1, 1], [], []>} : vector<2x64xbf16>, vector<64x128xbf16>, vector<2x128xf32> -> vector<2x128xf32>
    %65 = arith.addf %51, %64 : vector<2x128xf32>
    %66 = vector.extract_strided_slice %6 {offsets = [4, 0], sizes = [1, 64], strides = [1, 1]} : vector<8x64xf32> to vector<1x64xf32>
    %67 = vector.shape_cast %66 : vector<1x64xf32> to vector<1x64xf32>
    %68 = vector.broadcast %67 : vector<1x64xf32> to vector<2x64xf32>
    %c1_i32_22 = arith.constant 1 : i32
    %69 = vector.broadcast %c1_i32_22 : i32 to vector<2x64xi32>
    %70 = arith.cmpi eq, %8, %69 : vector<2x64xi32>
    %71 = vector.extract_strided_slice %7 {offsets = [4, 0], sizes = [1, 64], strides = [1, 1]} : vector<8x64xf32> to vector<1x64xf32>
    %72 = vector.shape_cast %71 : vector<1x64xf32> to vector<1x64xf32>
    %73 = vector.broadcast %72 : vector<1x64xf32> to vector<2x64xf32>
    %74 = arith.select %70, %73, %68 : vector<2x64xi1>, vector<2x64xf32>
    %75 = arith.truncf %74 : vector<2x64xf32> to vector<2x64xbf16>
    %c4 = arith.constant 4 : index
    %c0_23 = arith.constant 0 : index
    %c0_24 = arith.constant 0 : index
    %76 = vector.load %arg3[%c4, %c0_23, %c0_24] : memref<8x64x128xbf16, #tpu.memory_space<vmem>>, vector<1x64x128xbf16>
    %77 = vector.shape_cast %76 : vector<1x64x128xbf16> to vector<64x128xbf16>
    %cst_25 = arith.constant dense<0.000000e+00> : vector<2x128xf32>
    %78 = tpu.matmul %75, %77, %cst_25 {dimension_numbers = #tpu.dot_dimension_numbers<[1], [0], [0], [1], [0, 0, 1, 1], [], []>} : vector<2x64xbf16>, vector<64x128xbf16>, vector<2x128xf32> -> vector<2x128xf32>
    %79 = arith.addf %65, %78 : vector<2x128xf32>
    %80 = vector.extract_strided_slice %6 {offsets = [5, 0], sizes = [1, 64], strides = [1, 1]} : vector<8x64xf32> to vector<1x64xf32>
    %81 = vector.shape_cast %80 : vector<1x64xf32> to vector<1x64xf32>
    %82 = vector.broadcast %81 : vector<1x64xf32> to vector<2x64xf32>
    %c1_i32_26 = arith.constant 1 : i32
    %83 = vector.broadcast %c1_i32_26 : i32 to vector<2x64xi32>
    %84 = arith.cmpi eq, %8, %83 : vector<2x64xi32>
    %85 = vector.extract_strided_slice %7 {offsets = [5, 0], sizes = [1, 64], strides = [1, 1]} : vector<8x64xf32> to vector<1x64xf32>
    %86 = vector.shape_cast %85 : vector<1x64xf32> to vector<1x64xf32>
    %87 = vector.broadcast %86 : vector<1x64xf32> to vector<2x64xf32>
    %88 = arith.select %84, %87, %82 : vector<2x64xi1>, vector<2x64xf32>
    %89 = arith.truncf %88 : vector<2x64xf32> to vector<2x64xbf16>
    %c5 = arith.constant 5 : index
    %c0_27 = arith.constant 0 : index
    %c0_28 = arith.constant 0 : index
    %90 = vector.load %arg3[%c5, %c0_27, %c0_28] : memref<8x64x128xbf16, #tpu.memory_space<vmem>>, vector<1x64x128xbf16>
    %91 = vector.shape_cast %90 : vector<1x64x128xbf16> to vector<64x128xbf16>
    %cst_29 = arith.constant dense<0.000000e+00> : vector<2x128xf32>
    %92 = tpu.matmul %89, %91, %cst_29 {dimension_numbers = #tpu.dot_dimension_numbers<[1], [0], [0], [1], [0, 0, 1, 1], [], []>} : vector<2x64xbf16>, vector<64x128xbf16>, vector<2x128xf32> -> vector<2x128xf32>
    %93 = arith.addf %79, %92 : vector<2x128xf32>
    %94 = vector.extract_strided_slice %6 {offsets = [6, 0], sizes = [1, 64], strides = [1, 1]} : vector<8x64xf32> to vector<1x64xf32>
    %95 = vector.shape_cast %94 : vector<1x64xf32> to vector<1x64xf32>
    %96 = vector.broadcast %95 : vector<1x64xf32> to vector<2x64xf32>
    %c1_i32_30 = arith.constant 1 : i32
    %97 = vector.broadcast %c1_i32_30 : i32 to vector<2x64xi32>
    %98 = arith.cmpi eq, %8, %97 : vector<2x64xi32>
    %99 = vector.extract_strided_slice %7 {offsets = [6, 0], sizes = [1, 64], strides = [1, 1]} : vector<8x64xf32> to vector<1x64xf32>
    %100 = vector.shape_cast %99 : vector<1x64xf32> to vector<1x64xf32>
    %101 = vector.broadcast %100 : vector<1x64xf32> to vector<2x64xf32>
    %102 = arith.select %98, %101, %96 : vector<2x64xi1>, vector<2x64xf32>
    %103 = arith.truncf %102 : vector<2x64xf32> to vector<2x64xbf16>
    %c6 = arith.constant 6 : index
    %c0_31 = arith.constant 0 : index
    %c0_32 = arith.constant 0 : index
    %104 = vector.load %arg3[%c6, %c0_31, %c0_32] : memref<8x64x128xbf16, #tpu.memory_space<vmem>>, vector<1x64x128xbf16>
    %105 = vector.shape_cast %104 : vector<1x64x128xbf16> to vector<64x128xbf16>
    %cst_33 = arith.constant dense<0.000000e+00> : vector<2x128xf32>
    %106 = tpu.matmul %103, %105, %cst_33 {dimension_numbers = #tpu.dot_dimension_numbers<[1], [0], [0], [1], [0, 0, 1, 1], [], []>} : vector<2x64xbf16>, vector<64x128xbf16>, vector<2x128xf32> -> vector<2x128xf32>
    %107 = arith.addf %93, %106 : vector<2x128xf32>
    %108 = vector.extract_strided_slice %6 {offsets = [7, 0], sizes = [1, 64], strides = [1, 1]} : vector<8x64xf32> to vector<1x64xf32>
    %109 = vector.shape_cast %108 : vector<1x64xf32> to vector<1x64xf32>
    %110 = vector.broadcast %109 : vector<1x64xf32> to vector<2x64xf32>
    %c1_i32_34 = arith.constant 1 : i32
    %111 = vector.broadcast %c1_i32_34 : i32 to vector<2x64xi32>
    %112 = arith.cmpi eq, %8, %111 : vector<2x64xi32>
    %113 = vector.extract_strided_slice %7 {offsets = [7, 0], sizes = [1, 64], strides = [1, 1]} : vector<8x64xf32> to vector<1x64xf32>
    %114 = vector.shape_cast %113 : vector<1x64xf32> to vector<1x64xf32>
    %115 = vector.broadcast %114 : vector<1x64xf32> to vector<2x64xf32>
    %116 = arith.select %112, %115, %110 : vector<2x64xi1>, vector<2x64xf32>
    %117 = arith.truncf %116 : vector<2x64xf32> to vector<2x64xbf16>
    %c7 = arith.constant 7 : index
    %c0_35 = arith.constant 0 : index
    %c0_36 = arith.constant 0 : index
    %118 = vector.load %arg3[%c7, %c0_35, %c0_36] : memref<8x64x128xbf16, #tpu.memory_space<vmem>>, vector<1x64x128xbf16>
    %119 = vector.shape_cast %118 : vector<1x64x128xbf16> to vector<64x128xbf16>
    %cst_37 = arith.constant dense<0.000000e+00> : vector<2x128xf32>
    %120 = tpu.matmul %117, %119, %cst_37 {dimension_numbers = #tpu.dot_dimension_numbers<[1], [0], [0], [1], [0, 0, 1, 1], [], []>} : vector<2x64xbf16>, vector<64x128xbf16>, vector<2x128xf32> -> vector<2x128xf32>
    %121 = arith.addf %107, %120 : vector<2x128xf32>
    %c0_38 = arith.constant 0 : index
    %c0_39 = arith.constant 0 : index
    %122 = vector.load %arg4[%c0_38, %c0_39] : memref<1x128xf32, #tpu.memory_space<vmem>>, vector<1x128xf32>
    %c0_40 = arith.constant 0 : index
    %c0_41 = arith.constant 0 : index
    %123 = vector.load %arg5[%c0_40, %c0_41] : memref<1x128xf32, #tpu.memory_space<vmem>>, vector<1x128xf32>
    %cst_42 = arith.constant dense<0.000000e+00> : vector<128xf32>
    %124 = vector.multi_reduction <add>, %121, %cst_42 [0] : vector<2x128xf32> to vector<128xf32>
    %125 = vector.shape_cast %124 : vector<128xf32> to vector<1x128xf32>
    %cst_43 = arith.constant 2.000000e+00 : f32
    %126 = vector.broadcast %cst_43 : f32 to vector<1x128xf32>
    %127 = arith.divf %125, %126 : vector<1x128xf32>
    %128 = vector.broadcast %127 : vector<1x128xf32> to vector<2x128xf32>
    %129 = arith.subf %121, %128 : vector<2x128xf32>
    %130 = arith.mulf %129, %129 : vector<2x128xf32>
    %cst_44 = arith.constant dense<0.000000e+00> : vector<128xf32>
    %131 = vector.multi_reduction <add>, %130, %cst_44 [0] : vector<2x128xf32> to vector<128xf32>
    %132 = vector.shape_cast %131 : vector<128xf32> to vector<1x128xf32>
    %cst_45 = arith.constant 2.000000e+00 : f32
    %133 = vector.broadcast %cst_45 : f32 to vector<1x128xf32>
    %134 = arith.divf %132, %133 : vector<1x128xf32>
    %cst_46 = arith.constant 9.99999974E-6 : f32
    %135 = vector.broadcast %cst_46 : f32 to vector<1x128xf32>
    %136 = arith.addf %134, %135 : vector<1x128xf32>
    %137 = math.rsqrt %136 : vector<1x128xf32>
    %138 = arith.mulf %122, %137 : vector<1x128xf32>
    %139 = arith.mulf %127, %138 : vector<1x128xf32>
    %140 = arith.subf %123, %139 : vector<1x128xf32>
    %141 = vector.broadcast %138 : vector<1x128xf32> to vector<2x128xf32>
    %142 = arith.mulf %121, %141 : vector<2x128xf32>
    %143 = vector.broadcast %140 : vector<1x128xf32> to vector<2x128xf32>
    %144 = arith.addf %142, %143 : vector<2x128xf32>
    %cst_47 = arith.constant 0.000000e+00 : f32
    %145 = vector.broadcast %cst_47 : f32 to vector<2x128xf32>
    %146 = arith.maximumf %144, %145 : vector<2x128xf32>
    %147 = arith.truncf %146 : vector<2x128xf32> to vector<2x128xbf16>
    %c0_48 = arith.constant 0 : index
    %c0_49 = arith.constant 0 : index
    %148 = vector.load %arg6[%c0_48, %c0_49] : memref<128x128xbf16, #tpu.memory_space<vmem>>, vector<128x128xbf16>
    %cst_50 = arith.constant dense<0.000000e+00> : vector<2x128xf32>
    %149 = tpu.matmul %147, %148, %cst_50 {dimension_numbers = #tpu.dot_dimension_numbers<[1], [0], [0], [1], [0, 0, 1, 1], [], []>} : vector<2x128xbf16>, vector<128x128xbf16>, vector<2x128xf32> -> vector<2x128xf32>
    %c0_51 = arith.constant 0 : index
    %c0_52 = arith.constant 0 : index
    %150 = vector.load %arg7[%c0_51, %c0_52] : memref<1x128xf32, #tpu.memory_space<vmem>>, vector<1x128xf32>
    %c0_53 = arith.constant 0 : index
    %c0_54 = arith.constant 0 : index
    %151 = vector.load %arg8[%c0_53, %c0_54] : memref<1x128xf32, #tpu.memory_space<vmem>>, vector<1x128xf32>
    %cst_55 = arith.constant dense<0.000000e+00> : vector<128xf32>
    %152 = vector.multi_reduction <add>, %149, %cst_55 [0] : vector<2x128xf32> to vector<128xf32>
    %153 = vector.shape_cast %152 : vector<128xf32> to vector<1x128xf32>
    %cst_56 = arith.constant 2.000000e+00 : f32
    %154 = vector.broadcast %cst_56 : f32 to vector<1x128xf32>
    %155 = arith.divf %153, %154 : vector<1x128xf32>
    %156 = vector.broadcast %155 : vector<1x128xf32> to vector<2x128xf32>
    %157 = arith.subf %149, %156 : vector<2x128xf32>
    %158 = arith.mulf %157, %157 : vector<2x128xf32>
    %cst_57 = arith.constant dense<0.000000e+00> : vector<128xf32>
    %159 = vector.multi_reduction <add>, %158, %cst_57 [0] : vector<2x128xf32> to vector<128xf32>
    %160 = vector.shape_cast %159 : vector<128xf32> to vector<1x128xf32>
    %cst_58 = arith.constant 2.000000e+00 : f32
    %161 = vector.broadcast %cst_58 : f32 to vector<1x128xf32>
    %162 = arith.divf %160, %161 : vector<1x128xf32>
    %cst_59 = arith.constant 9.99999974E-6 : f32
    %163 = vector.broadcast %cst_59 : f32 to vector<1x128xf32>
    %164 = arith.addf %162, %163 : vector<1x128xf32>
    %165 = math.rsqrt %164 : vector<1x128xf32>
    %166 = arith.mulf %150, %165 : vector<1x128xf32>
    %167 = arith.mulf %155, %166 : vector<1x128xf32>
    %168 = arith.subf %151, %167 : vector<1x128xf32>
    %169 = vector.broadcast %166 : vector<1x128xf32> to vector<2x128xf32>
    %170 = arith.mulf %149, %169 : vector<2x128xf32>
    %171 = vector.broadcast %168 : vector<1x128xf32> to vector<2x128xf32>
    %172 = arith.addf %170, %171 : vector<2x128xf32>
    %cst_60 = arith.constant 0.000000e+00 : f32
    %173 = vector.broadcast %cst_60 : f32 to vector<2x128xf32>
    %174 = arith.maximumf %172, %173 : vector<2x128xf32>
    %175 = arith.truncf %174 : vector<2x128xf32> to vector<2x128xbf16>
    %c0_61 = arith.constant 0 : index
    %c0_62 = arith.constant 0 : index
    %176 = vector.load %arg9[%c0_61, %c0_62] : memref<128x128xbf16, #tpu.memory_space<vmem>>, vector<128x128xbf16>
    %cst_63 = arith.constant dense<0.000000e+00> : vector<2x128xf32>
    %177 = tpu.matmul %175, %176, %cst_63 {dimension_numbers = #tpu.dot_dimension_numbers<[1], [0], [0], [1], [0, 0, 1, 1], [], []>} : vector<2x128xbf16>, vector<128x128xbf16>, vector<2x128xf32> -> vector<2x128xf32>
    %c0_64 = arith.constant 0 : index
    %c0_65 = arith.constant 0 : index
    %178 = vector.load %arg10[%c0_64, %c0_65] : memref<1x128xf32, #tpu.memory_space<vmem>>, vector<1x128xf32>
    %179 = vector.broadcast %178 : vector<1x128xf32> to vector<2x128xf32>
    %180 = arith.addf %177, %179 : vector<2x128xf32>
    %c0_66 = arith.constant 0 : index
    %c0_67 = arith.constant 0 : index
    %181 = vector.load %arg11[%c0_66, %c0_67] : memref<2x128xf32, #tpu.memory_space<vmem>>, vector<2x128xf32>
    tpu.vector_store %arg11[%c0_66, %c0_67], %180 {strides = array<i32>} : memref<2x128xf32, #tpu.memory_space<vmem>>, vector<2x128xf32>,
    return
  }
}

</mosaic_0001>

<llo_original>
// kernel: barlowtwins_forward.1
$region0: #{barlowtwins_forward.1}
  #allocation0 [shape = 'u32[]', space=smem, size = 0x4, offset = 0x4, fixed_abs, tag = 'smem constant byte address 0x4 - core index']
  #allocation1 [shape = 'u32[72,128]{1,0:T(1,128)}', space=vmem, size = 0x9000, scoped, tag = 'internal scratch']
  %s0 = inlined_call_operand.vmem [shape: bf16[40,128], index: 0, kind: input, shape index: {}]
  %s1 = inlined_call_operand.vmem [shape: bf16[8,40], index: 1, kind: input, shape index: {}]
  %s2 = inlined_call_operand.vmem [shape: f32[8,1], index: 2, kind: input, shape index: {}]
  %s3 = inlined_call_operand.vmem [shape: bf16[8,64,128], index: 3, kind: input, shape index: {}]
  %s4 = inlined_call_operand.vmem [shape: f32[1,128], index: 4, kind: input, shape index: {}]
  %s5 = inlined_call_operand.vmem [shape: f32[1,128], index: 5, kind: input, shape index: {}]
  %s6 = inlined_call_operand.vmem [shape: bf16[128,128], index: 6, kind: input, shape index: {}]
  %s7 = inlined_call_operand.vmem [shape: f32[1,128], index: 7, kind: input, shape index: {}]
  %s8 = inlined_call_operand.vmem [shape: f32[1,128], index: 8, kind: input, shape index: {}]
  %s9 = inlined_call_operand.vmem [shape: bf16[128,128], index: 9, kind: input, shape index: {}]
  %s10 = inlined_call_operand.vmem [shape: f32[1,128], index: 10, kind: input, shape index: {}]
  %s11 = inlined_call_operand.hbm [shape: f32[2,128], index: 11, kind: output, shape index: {}]
  %s12 = sld [smem:[#allocation0]]
  $region54: #{barlowtwins_forward.1} parent=0
    _
  %s14 = ssub.s32 1, %s12
  %s15 = scalar_select 0, %s14, %s12
  $region1: #{barlowtwins_forward.1} parent=0
    #allocation2 [shape = 'u8[1024]{0}', space=vmem, size = 0x400, scoped, tag = 'output window, operand 0, single buffered']
    #allocation3 [shape = 's32[1]{0}', space=sflag, size = 0x4, scoped, tag = 'scoped memory for barlowtwins_forward.1']
    %16 = vsyncpa [#allocation3], 0
    // Predicated region
    $region2: #{barlowtwins_forward.1} parent=1 // pred_check
      _
    $region3: #{barlowtwins_forward.1} parent=1 // pred_check_branch
      %18 = sbr.rel (0) target = $region5
    $region4: #{barlowtwins_forward.1} parent=1 // pred_region
      _
    $region5: #{barlowtwins_forward.1} parent=1 // pred_fallthru
      _
    // Predicated region
    $region6: #{barlowtwins_forward.1} parent=1 // pred_check
      _
    $region7: #{barlowtwins_forward.1} parent=1 // pred_check_branch
      %20 = sbr.rel (0) target = $region9
    $region8: #{barlowtwins_forward.1} parent=1 // pred_region
      _
    $region9: #{barlowtwins_forward.1} parent=1 // pred_fallthru
      _
    // Predicated region
    $region10: #{barlowtwins_forward.1} parent=1 // pred_check
      _
    $region11: #{barlowtwins_forward.1} parent=1 // pred_check_branch
      %22 = sbr.rel (0) target = $region13
    $region12: #{barlowtwins_forward.1} parent=1 // pred_region
      _
    $region13: #{barlowtwins_forward.1} parent=1 // pred_fallthru
      _
    // Predicated region
    $region14: #{barlowtwins_forward.1} parent=1 // pred_check
      _
    $region15: #{barlowtwins_forward.1} parent=1 // pred_check_branch
      %24 = sbr.rel (0) target = $region17
    $region16: #{barlowtwins_forward.1} parent=1 // pred_region
      _
    $region17: #{barlowtwins_forward.1} parent=1 // pred_fallthru
      _
    // Predicated region
    $region18: #{barlowtwins_forward.1} parent=1 // pred_check
      _
    $region19: #{barlowtwins_forward.1} parent=1 // pred_check_branch
      %26 = sbr.rel (0) target = $region21
    $region20: #{barlowtwins_forward.1} parent=1 // pred_region
      _
    $region21: #{barlowtwins_forward.1} parent=1 // pred_fallthru
      _
    // Predicated region
    $region22: #{barlowtwins_forward.1} parent=1 // pred_check
      _
    $region23: #{barlowtwins_forward.1} parent=1 // pred_check_branch
      %28 = sbr.rel (0) target = $region25
    $region24: #{barlowtwins_forward.1} parent=1 // pred_region
      _
    $region25: #{barlowtwins_forward.1} parent=1 // pred_fallthru
      _
    // Predicated region
    $region26: #{barlowtwins_forward.1} parent=1 // pred_check
      _
    $region27: #{barlowtwins_forward.1} parent=1 // pred_check_branch
      %30 = sbr.rel (0) target = $region29
    $region28: #{barlowtwins_forward.1} parent=1 // pred_region
      _
    $region29: #{barlowtwins_forward.1} parent=1 // pred_fallthru
      _
    // Predicated region
    $region30: #{barlowtwins_forward.1} parent=1 // pred_check
      _
    $region31: #{barlowtwins_forward.1} parent=1 // pred_check_branch
      %32 = sbr.rel (0) target = $region33
    $region32: #{barlowtwins_forward.1} parent=1 // pred_region
      _
    $region33: #{barlowtwins_forward.1} parent=1 // pred_fallthru
      _
    // Predicated region
    $region34: #{barlowtwins_forward.1} parent=1 // pred_check
      _
    $region35: #{barlowtwins_forward.1} parent=1 // pred_check_branch
      %34 = sbr.rel (0) target = $region37
    $region36: #{barlowtwins_forward.1} parent=1 // pred_region
      _
    $region37: #{barlowtwins_forward.1} parent=1 // pred_fallthru
      _
    // Predicated region
    $region38: #{barlowtwins_forward.1} parent=1 // pred_check
      _
    $region39: #{barlowtwins_forward.1} parent=1 // pred_check_branch
      %36 = sbr.rel (0) target = $region41
    $region40: #{barlowtwins_forward.1} parent=1 // pred_region
      _
    $region41: #{barlowtwins_forward.1} parent=1 // pred_fallthru
      _
    // Predicated region
    $region42: #{barlowtwins_forward.1} parent=1 // pred_check
      _
    $region43: #{barlowtwins_forward.1} parent=1 // pred_check_branch
      %38 = sbr.rel (0) target = $region45
    $region44: #{barlowtwins_forward.1} parent=1 // pred_region
      _
    $region45: #{barlowtwins_forward.1} parent=1 // pred_fallthru
      _
    %v40 = vld [vmem:[%s1] sm:$0xf]
    %v41 = vld [vmem:[%s0] sm:$0xf]
    %v42 = vld [vmem:[%s0 + $0x4] sm:$0xf]
    %v43 = vld [vmem:[%s0 + $0x8] sm:$0xf]
    %v44 = vld [vmem:[%s0 + $0xc] sm:$0xf]
    %v45 = vld [vmem:[%s0 + $0x10] sm:$0xf]
    %v46 = vld [vmem:[%s2] sm:$0xff]
    %48 = vset.pattern.permute.xlu0 0
    %49 = vperm.xlu0 %48, %v46
    %v50 = vpop.permute.xlu0 %49
    %v57 = vunpack.c.l.b16 %v41
    %v58 = vunpack.c.l.b16 %v42
    %v59 = vunpack.c.l.b16 %v43
    %v60 = vunpack.c.l.b16 %v44
    %v61 = vunpack.c.l.b16 %v45
    %v62 = vpack.c.b16 %v58, %v57
    %v63 = vpack.c.b16 %v60, %v59
    %v64 = vpack.c.b16 %v61, %v61
    %vm67 = vcmask 326656
    %v69 = vsel %vm67, %v40, 0
    %vm71 = vcmask 1043456
    %v73 = vsel %vm71, %v64, 0
    %75 = vmatpush.bf16.msra.mxu0 0
    %76 = vmatpush.bf16.msra.mxu0 0
    %77 = vmatpush.bf16.msra.mxu0 0
    %78 = vmatpush.bf16.msra.mxu0 0
    %79 = vmatpush.bf16.msra.mxu0 0
    %80 = vmatpush.bf16.msra.mxu0 %v73
    %81 = vmatpush.bf16.msra.mxu0 %v63
    %82 = vmatpush.bf16.msra.mxu0 %v62
    %83 = vmatmul.bf16.gmra.mxu0 %v69
    %v84 = vpop.f32.mrf.mxu0
    %v85 = vadd.f32 %v50, %v84
    %v86 = vpop.f32.mrf.mxu0
    %87 = vdwg.mxu0
    %v88 = vlaneseq
    %v89 = vshrl.u32 %v88, 7
    %v90 = vperm.slane %v85, 0
    %vm91 = vcmp.eq.s32.totalorder %v89, 1
    %93 = vrot.lane.b32.xlu0 %v90, 64
    %v94 = vpop.permute.xlu0 %93
    %v96 = vsel %vm91, %v90, %v94
    %v97 = vpack.c.bf16 %v96, %v96
    %v98 = vld [vmem:[%s3] sm:$0xf]
    %v99 = vld [vmem:[%s3 + $0x4] sm:$0xf]
    %v100 = vld [vmem:[%s3 + $0x8] sm:$0xf]
    %v101 = vld [vmem:[%s3 + $0xc] sm:$0xf]
    %v102 = vld [vmem:[%s3 + $0x10] sm:$0xf]
    %v103 = vld [vmem:[%s3 + $0x14] sm:$0xf]
    %v104 = vld [vmem:[%s3 + $0x18] sm:$0xf]
    %v105 = vld [vmem:[%s3 + $0x1c] sm:$0xf]
    %v106 = vperm.slane %v85, 1
    %108 = vrot.lane.b32.xlu0 %v106, 64
    %v109 = vpop.permute.xlu0 %108
    %v111 = vsel %vm91, %v106, %v109
    %v112 = vpack.c.bf16 %v111, %v111
    %s113 = scalar_lea.vmem %s3, 32
    %v114 = vld [vmem:[%s113] sm:$0xf]
    %v115 = vld [vmem:[%s113 + $0x4] sm:$0xf]
    %v116 = vld [vmem:[%s113 + $0x8] sm:$0xf]
    %v117 = vld [vmem:[%s113 + $0xc] sm:$0xf]
    %v118 = vld [vmem:[%s113 + $0x10] sm:$0xf]
    %v119 = vld [vmem:[%s113 + $0x14] sm:$0xf]
    %v120 = vld [vmem:[%s113 + $0x18] sm:$0xf]
    %v121 = vld [vmem:[%s113 + $0x1c] sm:$0xf]
    %123 = vrot.lane.b32.xlu0 %v112, 64
    %v124 = vpop.permute.xlu0 %123
    %v133 = vunpack.c.l.b16 %v114
    %v134 = vunpack.c.l.b16 %v115
    %v135 = vunpack.c.l.b16 %v116
    %v136 = vunpack.c.l.b16 %v117
    %v137 = vunpack.c.l.b16 %v118
    %v138 = vunpack.c.l.b16 %v119
    %v139 = vunpack.c.l.b16 %v120
    %v140 = vunpack.c.l.b16 %v121
    %v141 = vpack.c.b16 %v134, %v133
    %v142 = vpack.c.b16 %v136, %v135
    %v143 = vpack.c.b16 %v138, %v137
    %v144 = vpack.c.b16 %v140, %v139
    %vm149 = vcmask 523264
    %v151 = vsel %vm149, %v124, 0
    %153 = vmatpush.bf16.msra.mxu0 0
    %154 = vmatpush.bf16.msra.mxu0 0
    %155 = vmatpush.bf16.msra.mxu0 0
    %156 = vmatpush.bf16.msra.mxu0 0
    %157 = vmatpush.bf16.msra.mxu0 %v144
    %158 = vmatpush.bf16.msra.mxu0 %v143
    %159 = vmatpush.bf16.msra.mxu0 %v142
    %160 = vmatpush.bf16.msra.mxu0 %v141
    %161 = vmatmul.bf16.gmra.mxu0 %v151
    %v162 = vpop.f32.mrf.mxu0
    %v163 = vadd.f32 0.0, %v162
    %v164 = vpop.f32.mrf.mxu0
    %165 = vdwg.mxu0
    %167 = vrot.lane.b32.xlu0 %v97, 64
    %v168 = vpop.permute.xlu0 %167
    %v177 = vunpack.c.l.b16 %v98
    %v178 = vunpack.c.l.b16 %v99
    %v179 = vunpack.c.l.b16 %v100
    %v180 = vunpack.c.l.b16 %v101
    %v181 = vunpack.c.l.b16 %v102
    %v182 = vunpack.c.l.b16 %v103
    %v183 = vunpack.c.l.b16 %v104
    %v184 = vunpack.c.l.b16 %v105
    %v185 = vpack.c.b16 %v178, %v177
    %v186 = vpack.c.b16 %v180, %v179
    %v187 = vpack.c.b16 %v182, %v181
    %v188 = vpack.c.b16 %v184, %v183
    %v194 = vsel %vm149, %v168, 0
    %196 = vmatpush.bf16.msra.mxu0 0
    %197 = vmatpush.bf16.msra.mxu0 0
    %198 = vmatpush.bf16.msra.mxu0 0
    %199 = vmatpush.bf16.msra.mxu0 0
    %200 = vmatpush.bf16.msra.mxu0 %v188
    %201 = vmatpush.bf16.msra.mxu0 %v187
    %202 = vmatpush.bf16.msra.mxu0 %v186
    %203 = vmatpush.bf16.msra.mxu0 %v185
    %204 = vmatmul.bf16.gmra.mxu0 %v194
    %v205 = vpop.f32.mrf.mxu0
    %v206 = vadd.f32 %v163, %v205
    %v207 = vpop.f32.mrf.mxu0
    %208 = vdwg.mxu0
    %v209 = vperm.slane %v85, 2
    %211 = vrot.lane.b32.xlu0 %v209, 64
    %v212 = vpop.permute.xlu0 %211
    %v214 = vsel %vm91, %v209, %v212
    %v215 = vpack.c.bf16 %v214, %v214
    %s216 = scalar_lea.vmem %s3, 64
    %v217 = vld [vmem:[%s216] sm:$0xf]
    %v218 = vld [vmem:[%s216 + $0x4] sm:$0xf]
    %v219 = vld [vmem:[%s216 + $0x8] sm:$0xf]
    %v220 = vld [vmem:[%s216 + $0xc] sm:$0xf]
    %v221 = vld [vmem:[%s216 + $0x10] sm:$0xf]
    %v222 = vld [vmem:[%s216 + $0x14] sm:$0xf]
    %v223 = vld [vmem:[%s216 + $0x18] sm:$0xf]
    %v224 = vld [vmem:[%s216 + $0x1c] sm:$0xf]
    %226 = vrot.lane.b32.xlu0 %v215, 64
    %v227 = vpop.permute.xlu0 %226
    %v236 = vunpack.c.l.b16 %v217
    %v237 = vunpack.c.l.b16 %v218
    %v238 = vunpack.c.l.b16 %v219
    %v239 = vunpack.c.l.b16 %v220
    %v240 = vunpack.c.l.b16 %v221
    %v241 = vunpack.c.l.b16 %v222
    %v242 = vunpack.c.l.b16 %v223
    %v243 = vunpack.c.l.b16 %v224
    %v244 = vpack.c.b16 %v237, %v236
    %v245 = vpack.c.b16 %v239, %v238
    %v246 = vpack.c.b16 %v241, %v240
    %v247 = vpack.c.b16 %v243, %v242
    %v253 = vsel %vm149, %v227, 0
    %255 = vmatpush.bf16.msra.mxu0 0
    %256 = vmatpush.bf16.msra.mxu0 0
    %257 = vmatpush.bf16.msra.mxu0 0
    %258 = vmatpush.bf16.msra.mxu0 0
    %259 = vmatpush.bf16.msra.mxu0 %v247
    %260 = vmatpush.bf16.msra.mxu0 %v246
    %261 = vmatpush.bf16.msra.mxu0 %v245
    %262 = vmatpush.bf16.msra.mxu0 %v244
    %263 = vmatmul.bf16.gmra.mxu0 %v253
    %v264 = vpop.f32.mrf.mxu0
    %v265 = vadd.f32 0.0, %v264
    %v266 = vpop.f32.mrf.mxu0
    %267 = vdwg.mxu0
    %v268 = vadd.f32 %v206, %v265
    %v269 = vperm.slane %v85, 3
    %271 = vrot.lane.b32.xlu0 %v269, 64
    %v272 = vpop.permute.xlu0 %271
    %v274 = vsel %vm91, %v269, %v272
    %v275 = vpack.c.bf16 %v274, %v274
    %s276 = scalar_lea.vmem %s3, 96
    %v277 = vld [vmem:[%s276] sm:$0xf]
    %v278 = vld [vmem:[%s276 + $0x4] sm:$0xf]
    %v279 = vld [vmem:[%s276 + $0x8] sm:$0xf]
    %v280 = vld [vmem:[%s276 + $0xc] sm:$0xf]
    %v281 = vld [vmem:[%s276 + $0x10] sm:$0xf]
    %v282 = vld [vmem:[%s276 + $0x14] sm:$0xf]
    %v283 = vld [vmem:[%s276 + $0x18] sm:$0xf]
    %v284 = vld [vmem:[%s276 + $0x1c] sm:$0xf]
    %286 = vrot.lane.b32.xlu0 %v275, 64
    %v287 = vpop.permute.xlu0 %286
    %v296 = vunpack.c.l.b16 %v277
    %v297 = vunpack.c.l.b16 %v278
    %v298 = vunpack.c.l.b16 %v279
    %v299 = vunpack.c.l.b16 %v280
    %v300 = vunpack.c.l.b16 %v281
    %v301 = vunpack.c.l.b16 %v282
    %v302 = vunpack.c.l.b16 %v283
    %v303 = vunpack.c.l.b16 %v284
    %v304 = vpack.c.b16 %v297, %v296
    %v305 = vpack.c.b16 %v299, %v298
    %v306 = vpack.c.b16 %v301, %v300
    %v307 = vpack.c.b16 %v303, %v302
    %v313 = vsel %vm149, %v287, 0
    %315 = vmatpush.bf16.msra.mxu0 0
    %316 = vmatpush.bf16.msra.mxu0 0
    %317 = vmatpush.bf16.msra.mxu0 0
    %318 = vmatpush.bf16.msra.mxu0 0
    %319 = vmatpush.bf16.msra.mxu0 %v307
    %320 = vmatpush.bf16.msra.mxu0 %v306
    %321 = vmatpush.bf16.msra.mxu0 %v305
    %322 = vmatpush.bf16.msra.mxu0 %v304
    %323 = vmatmul.bf16.gmra.mxu0 %v313
    %v324 = vpop.f32.mrf.mxu0
    %v325 = vadd.f32 0.0, %v324
    %v326 = vpop.f32.mrf.mxu0
    %327 = vdwg.mxu0
    %v328 = vadd.f32 %v268, %v325
    %v329 = vperm.slane %v85, 4
    %331 = vrot.lane.b32.xlu0 %v329, 64
    %v332 = vpop.permute.xlu0 %331
    %v334 = vsel %vm91, %v329, %v332
    %v335 = vpack.c.bf16 %v334, %v334
    %s336 = scalar_lea.vmem %s3, 128
    %v337 = vld [vmem:[%s336] sm:$0xf]
    %v338 = vld [vmem:[%s336 + $0x4] sm:$0xf]
    %v339 = vld [vmem:[%s336 + $0x8] sm:$0xf]
    %v340 = vld [vmem:[%s336 + $0xc] sm:$0xf]
    %v341 = vld [vmem:[%s336 + $0x10] sm:$0xf]
    %v342 = vld [vmem:[%s336 + $0x14] sm:$0xf]
    %v343 = vld [vmem:[%s336 + $0x18] sm:$0xf]
    %v344 = vld [vmem:[%s336 + $0x1c] sm:$0xf]
    %346 = vrot.lane.b32.xlu0 %v335, 64
    %v347 = vpop.permute.xlu0 %346
    %v356 = vunpack.c.l.b16 %v337
    %v357 = vunpack.c.l.b16 %v338
    %v358 = vunpack.c.l.b16 %v339
    %v359 = vunpack.c.l.b16 %v340
    %v360 = vunpack.c.l.b16 %v341
    %v361 = vunpack.c.l.b16 %v342
    %v362 = vunpack.c.l.b16 %v343
    %v363 = vunpack.c.l.b16 %v344
    %v364 = vpack.c.b16 %v357, %v356
    %v365 = vpack.c.b16 %v359, %v358
    %v366 = vpack.c.b16 %v361, %v360
    %v367 = vpack.c.b16 %v363, %v362
    %v373 = vsel %vm149, %v347, 0
    %375 = vmatpush.bf16.msra.mxu0 0
    %376 = vmatpush.bf16.msra.mxu0 0
    %377 = vmatpush.bf16.msra.mxu0 0
    %378 = vmatpush.bf16.msra.mxu0 0
    %379 = vmatpush.bf16.msra.mxu0 %v367
    %380 = vmatpush.bf16.msra.mxu0 %v366
    %381 = vmatpush.bf16.msra.mxu0 %v365
    %382 = vmatpush.bf16.msra.mxu0 %v364
    %383 = vmatmul.bf16.gmra.mxu0 %v373
    %v384 = vpop.f32.mrf.mxu0
    %v385 = vadd.f32 0.0, %v384
    %v386 = vpop.f32.mrf.mxu0
    %387 = vdwg.mxu0
    %v388 = vadd.f32 %v328, %v385
    %v389 = vperm.slane %v85, 5
    %391 = vrot.lane.b32.xlu0 %v389, 64
    %v392 = vpop.permute.xlu0 %391
    %v394 = vsel %vm91, %v389, %v392
    %v395 = vpack.c.bf16 %v394, %v394
    %s396 = scalar_lea.vmem %s3, 160
    %v397 = vld [vmem:[%s396] sm:$0xf]
    %v398 = vld [vmem:[%s396 + $0x4] sm:$0xf]
    %v399 = vld [vmem:[%s396 + $0x8] sm:$0xf]
    %v400 = vld [vmem:[%s396 + $0xc] sm:$0xf]
    %v401 = vld [vmem:[%s396 + $0x10] sm:$0xf]
    %v402 = vld [vmem:[%s396 + $0x14] sm:$0xf]
    %v403 = vld [vmem:[%s396 + $0x18] sm:$0xf]
    %v404 = vld [vmem:[%s396 + $0x1c] sm:$0xf]
    %406 = vrot.lane.b32.xlu0 %v395, 64
    %v407 = vpop.permute.xlu0 %406
    %v416 = vunpack.c.l.b16 %v397
    %v417 = vunpack.c.l.b16 %v398
    %v418 = vunpack.c.l.b16 %v399
    %v419 = vunpack.c.l.b16 %v400
    %v420 = vunpack.c.l.b16 %v401
    %v421 = vunpack.c.l.b16 %v402
    %v422 = vunpack.c.l.b16 %v403
    %v423 = vunpack.c.l.b16 %v404
    %v424 = vpack.c.b16 %v417, %v416
    %v425 = vpack.c.b16 %v419, %v418
    %v426 = vpack.c.b16 %v421, %v420
    %v427 = vpack.c.b16 %v423, %v422
    %v433 = vsel %vm149, %v407, 0
    %435 = vmatpush.bf16.msra.mxu0 0
    %436 = vmatpush.bf16.msra.mxu0 0
    %437 = vmatpush.bf16.msra.mxu0 0
    %438 = vmatpush.bf16.msra.mxu0 0
    %439 = vmatpush.bf16.msra.mxu0 %v427
    %440 = vmatpush.bf16.msra.mxu0 %v426
    %441 = vmatpush.bf16.msra.mxu0 %v425
    %442 = vmatpush.bf16.msra.mxu0 %v424
    %443 = vmatmul.bf16.gmra.mxu0 %v433
    %v444 = vpop.f32.mrf.mxu0
    %v445 = vadd.f32 0.0, %v444
    %v446 = vpop.f32.mrf.mxu0
    %447 = vdwg.mxu0
    %v448 = vadd.f32 %v388, %v445
    %v449 = vperm.slane %v85, 6
    %451 = vrot.lane.b32.xlu0 %v449, 64
    %v452 = vpop.permute.xlu0 %451
    %v454 = vsel %vm91, %v449, %v452
    %v455 = vpack.c.bf16 %v454, %v454
    %s456 = scalar_lea.vmem %s3, 192
    %v457 = vld [vmem:[%s456] sm:$0xf]
    %v458 = vld [vmem:[%s456 + $0x4] sm:$0xf]
    %v459 = vld [vmem:[%s456 + $0x8] sm:$0xf]
    %v460 = vld [vmem:[%s456 + $0xc] sm:$0xf]
    %v461 = vld [vmem:[%s456 + $0x10] sm:$0xf]
    %v462 = vld [vmem:[%s456 + $0x14] sm:$0xf]
    %v463 = vld [vmem:[%s456 + $0x18] sm:$0xf]
    %v464 = vld [vmem:[%s456 + $0x1c] sm:$0xf]
    %466 = vrot.lane.b32.xlu0 %v455, 64
    %v467 = vpop.permute.xlu0 %466
    %v476 = vunpack.c.l.b16 %v457
    %v477 = vunpack.c.l.b16 %v458
    %v478 = vunpack.c.l.b16 %v459
    %v479 = vunpack.c.l.b16 %v460
    %v480 = vunpack.c.l.b16 %v461
    %v481 = vunpack.c.l.b16 %v462
    %v482 = vunpack.c.l.b16 %v463
    %v483 = vunpack.c.l.b16 %v464
    %v484 = vpack.c.b16 %v477, %v476
    %v485 = vpack.c.b16 %v479, %v478
    %v486 = vpack.c.b16 %v481, %v480
    %v487 = vpack.c.b16 %v483, %v482
    %v493 = vsel %vm149, %v467, 0
    %495 = vmatpush.bf16.msra.mxu0 0
    %496 = vmatpush.bf16.msra.mxu0 0
    %497 = vmatpush.bf16.msra.mxu0 0
    %498 = vmatpush.bf16.msra.mxu0 0
    %499 = vmatpush.bf16.msra.mxu0 %v487
    %500 = vmatpush.bf16.msra.mxu0 %v486
    %501 = vmatpush.bf16.msra.mxu0 %v485
    %502 = vmatpush.bf16.msra.mxu0 %v484
    %503 = vmatmul.bf16.gmra.mxu0 %v493
    %v504 = vpop.f32.mrf.mxu0
    %v505 = vadd.f32 0.0, %v504
    %v506 = vpop.f32.mrf.mxu0
    %507 = vdwg.mxu0
    %v508 = vadd.f32 %v448, %v505
    %v509 = vperm.slane %v85, 7
    %511 = vrot.lane.b32.xlu0 %v509, 64
    %v512 = vpop.permute.xlu0 %511
    %v514 = vsel %vm91, %v509, %v512
    %v515 = vpack.c.bf16 %v514, %v514
    %s516 = scalar_lea.vmem %s3, 224
    %v517 = vld [vmem:[%s516] sm:$0xf]
    %v518 = vld [vmem:[%s516 + $0x4] sm:$0xf]
    %v519 = vld [vmem:[%s516 + $0x8] sm:$0xf]
    %v520 = vld [vmem:[%s516 + $0xc] sm:$0xf]
    %v521 = vld [vmem:[%s516 + $0x10] sm:$0xf]
    %v522 = vld [vmem:[%s516 + $0x14] sm:$0xf]
    %v523 = vld [vmem:[%s516 + $0x18] sm:$0xf]
    %v524 = vld [vmem:[%s516 + $0x1c] sm:$0xf]
    %526 = vrot.lane.b32.xlu0 %v515, 64
    %v527 = vpop.permute.xlu0 %526
    %v536 = vunpack.c.l.b16 %v517
    %v537 = vunpack.c.l.b16 %v518
    %v538 = vunpack.c.l.b16 %v519
    %v539 = vunpack.c.l.b16 %v520
    %v540 = vunpack.c.l.b16 %v521
    %v541 = vunpack.c.l.b16 %v522
    %v542 = vunpack.c.l.b16 %v523
    %v543 = vunpack.c.l.b16 %v524
    %v544 = vpack.c.b16 %v537, %v536
    %v545 = vpack.c.b16 %v539, %v538
    %v546 = vpack.c.b16 %v541, %v540
    %v547 = vpack.c.b16 %v543, %v542
    %v553 = vsel %vm149, %v527, 0
    %555 = vmatpush.bf16.msra.mxu0 0
    %556 = vmatpush.bf16.msra.mxu0 0
    %557 = vmatpush.bf16.msra.mxu0 0
    %558 = vmatpush.bf16.msra.mxu0 0
    %559 = vmatpush.bf16.msra.mxu0 %v547
    %560 = vmatpush.bf16.msra.mxu0 %v546
    %561 = vmatpush.bf16.msra.mxu0 %v545
    %562 = vmatpush.bf16.msra.mxu0 %v544
    %563 = vmatmul.bf16.gmra.mxu0 %v553
    %v564 = vpop.f32.mrf.mxu0
    %v565 = vadd.f32 0.0, %v564
    %v566 = vpop.f32.mrf.mxu0
    %567 = vdwg.mxu0
    %v568 = vadd.f32 %v508, %v565
    %v569 = vld [vmem:[%s4] sm:$0x1]
    %v570 = vld [vmem:[%s5] sm:$0x1]
    %vm571 = vcmask 1041408
    %v572 = vsel %vm571, %v568, 0.0
    %v573 = vrot.slane %v572, 4
    %v574 = vadd.f32 %v572, %v573
    %v575 = vrot.slane %v574, 2
    %v576 = vadd.f32 %v574, %v575
    %v577 = vrot.slane %v576, 1
    %v578 = vadd.f32 %v576, %v577
    %v579 = vrcp.pop 2.0
    %v580 = vmul.f32 2.0, %v579
    %v581 = vsub.f32 1.0, %v580
    %v582 = vmul.f32 %v579, %v581
    %v583 = vadd.f32 %v579, %v582
    %vm584 = vweird.f32 %v579
    %v585 = vsel %vm584, %v579, %v583
    %v586 = vmul.f32 %v578, %v585
    %v587 = vsub.f32 %v568, %v586
    %v588 = vmul.f32 %v587, %v587
    %v589 = vsel %vm571, %v588, 0.0
    %v590 = vrot.slane %v589, 4
    %v591 = vadd.f32 %v589, %v590
    %v592 = vrot.slane %v591, 2
    %v593 = vadd.f32 %v591, %v592
    %v594 = vrot.slane %v593, 1
    %v595 = vadd.f32 %v593, %v594
    %v596 = vmul.f32 %v595, %v585
    %v597 = vadd.f32 %v596, 1e-05
    %v598 = vrsqrt.pop %v597
    %v599 = vmul.f32 %v598, %v597
    %v600 = vmul.f32 %v599, %v598
    %v601 = vmul.f32 0.5, %v600
    %v602 = vsub.f32 1.5, %v601
    %v603 = vmul.f32 %v598, %v602
    %vm604 = vweird.f32 %v597
    %vm605 = vweird.f32 %v598
    %vm606 = vmor %vm604, %vm605
    %v607 = vsel %vm606, %v598, %v603
    %v608 = vmul.f32 %v569, %v607
    %v609 = vmul.f32 %v586, %v608
    %v610 = vsub.f32 %v570, %v609
    %v612 = vperm.slane %v608, 0
    %v614 = vmul.f32 %v568, %v612
    %v616 = vperm.slane %v610, 0
    %v618 = vadd.f32 %v614, %v616
    %v619 = vmax.f32 %v618, 0.0
    %v620 = vpack.c.bf16 %v619, %v619
    %v621 = vld [vmem:[%s6] sm:$0xf]
    %v622 = vld [vmem:[%s6 + $0x4] sm:$0xf]
    %v623 = vld [vmem:[%s6 + $0x8] sm:$0xf]
    %v624 = vld [vmem:[%s6 + $0xc] sm:$0xf]
    %v625 = vld [vmem:[%s6 + $0x10] sm:$0xf]
    %v626 = vld [vmem:[%s6 + $0x14] sm:$0xf]
    %v627 = vld [vmem:[%s6 + $0x18] sm:$0xf]
    %v628 = vld [vmem:[%s6 + $0x1c] sm:$0xf]
    %v629 = vld [vmem:[%s6 + $0x20] sm:$0xf]
    %v630 = vld [vmem:[%s6 + $0x24] sm:$0xf]
    %v631 = vld [vmem:[%s6 + $0x28] sm:$0xf]
    %v632 = vld [vmem:[%s6 + $0x2c] sm:$0xf]
    %v633 = vld [vmem:[%s6 + $0x30] sm:$0xf]
    %v634 = vld [vmem:[%s6 + $0x34] sm:$0xf]
    %v635 = vld [vmem:[%s6 + $0x38] sm:$0xf]
    %v636 = vld [vmem:[%s6 + $0x3c] sm:$0xf]
    %v653 = vunpack.c.l.b16 %v621
    %v654 = vunpack.c.l.b16 %v622
    %v655 = vunpack.c.l.b16 %v623
    %v656 = vunpack.c.l.b16 %v624
    %v657 = vunpack.c.l.b16 %v625
    %v658 = vunpack.c.l.b16 %v626
    %v659 = vunpack.c.l.b16 %v627
    %v660 = vunpack.c.l.b16 %v628
    %v661 = vunpack.c.l.b16 %v629
    %v662 = vunpack.c.l.b16 %v630
    %v663 = vunpack.c.l.b16 %v631
    %v664 = vunpack.c.l.b16 %v632
    %v665 = vunpack.c.l.b16 %v633
    %v666 = vunpack.c.l.b16 %v634
    %v667 = vunpack.c.l.b16 %v635
    %v668 = vunpack.c.l.b16 %v636
    %v669 = vpack.c.b16 %v654, %v653
    %v670 = vpack.c.b16 %v656, %v655
    %v671 = vpack.c.b16 %v658, %v657
    %v672 = vpack.c.b16 %v660, %v659
    %v673 = vpack.c.b16 %v662, %v661
    %v674 = vpack.c.b16 %v664, %v663
    %v675 = vpack.c.b16 %v666, %v665
    %v676 = vpack.c.b16 %v668, %v667
    %685 = vmatpush.bf16.msra.mxu0 %v676
    %686 = vmatpush.bf16.msra.mxu0 %v675
    %687 = vmatpush.bf16.msra.mxu0 %v674
    %688 = vmatpush.bf16.msra.mxu0 %v673
    %689 = vmatpush.bf16.msra.mxu0 %v672
    %690 = vmatpush.bf16.msra.mxu0 %v671
    %691 = vmatpush.bf16.msra.mxu0 %v670
    %692 = vmatpush.bf16.msra.mxu0 %v669
    %693 = vmatmul.bf16.gmra.mxu0 %v620
    %v694 = vpop.f32.mrf.mxu0
    %v695 = vadd.f32 0.0, %v694
    %v696 = vpop.f32.mrf.mxu0
    %697 = vdwg.mxu0
    %v698 = vld [vmem:[%s7] sm:$0x1]
    %v699 = vld [vmem:[%s8] sm:$0x1]
    %v700 = vsel %vm571, %v695, 0.0
    %v701 = vrot.slane %v700, 4
    %v702 = vadd.f32 %v700, %v701
    %v703 = vrot.slane %v702, 2
    %v704 = vadd.f32 %v702, %v703
    %v705 = vrot.slane %v704, 1
    %v706 = vadd.f32 %v704, %v705
    %v707 = vmul.f32 %v706, %v585
    %v708 = vsub.f32 %v695, %v707
    %v709 = vmul.f32 %v708, %v708
    %v710 = vsel %vm571, %v709, 0.0
    %v711 = vrot.slane %v710, 4
    %v712 = vadd.f32 %v710, %v711
    %v713 = vrot.slane %v712, 2
    %v714 = vadd.f32 %v712, %v713
    %v715 = vrot.slane %v714, 1
    %v716 = vadd.f32 %v714, %v715
    %v717 = vmul.f32 %v716, %v585
    %v718 = vadd.f32 %v717, 1e-05
    %v719 = vrsqrt.pop %v718
    %v720 = vmul.f32 %v719, %v718
    %v721 = vmul.f32 %v720, %v719
    %v722 = vmul.f32 0.5, %v721
    %v723 = vsub.f32 1.5, %v722
    %v724 = vmul.f32 %v719, %v723
    %vm725 = vweird.f32 %v718
    %vm726 = vweird.f32 %v719
    %vm727 = vmor %vm725, %vm726
    %v728 = vsel %vm727, %v719, %v724
    %v729 = vmul.f32 %v698, %v728
    %v730 = vmul.f32 %v707, %v729
    %v731 = vsub.f32 %v699, %v730
    %v733 = vperm.slane %v729, 0
    %v735 = vmul.f32 %v695, %v733
    %v737 = vperm.slane %v731, 0
    %v739 = vadd.f32 %v735, %v737
    %v740 = vmax.f32 %v739, 0.0
    %v741 = vpack.c.bf16 %v740, %v740
    %v742 = vld [vmem:[%s9] sm:$0xf]
    %v743 = vld [vmem:[%s9 + $0x4] sm:$0xf]
    %v744 = vld [vmem:[%s9 + $0x8] sm:$0xf]
    %v745 = vld [vmem:[%s9 + $0xc] sm:$0xf]
    %v746 = vld [vmem:[%s9 + $0x10] sm:$0xf]
    %v747 = vld [vmem:[%s9 + $0x14] sm:$0xf]
    %v748 = vld [vmem:[%s9 + $0x18] sm:$0xf]
    %v749 = vld [vmem:[%s9 + $0x1c] sm:$0xf]
    %v750 = vld [vmem:[%s9 + $0x20] sm:$0xf]
    %v751 = vld [vmem:[%s9 + $0x24] sm:$0xf]
    %v752 = vld [vmem:[%s9 + $0x28] sm:$0xf]
    %v753 = vld [vmem:[%s9 + $0x2c] sm:$0xf]
    %v754 = vld [vmem:[%s9 + $0x30] sm:$0xf]
    %v755 = vld [vmem:[%s9 + $0x34] sm:$0xf]
    %v756 = vld [vmem:[%s9 + $0x38] sm:$0xf]
    %v757 = vld [vmem:[%s9 + $0x3c] sm:$0xf]
    %v758 = vld [vmem:[%s10] sm:$0x1]
    %v760 = vperm.slane %v758, 0
    %v778 = vunpack.c.l.b16 %v742
    %v779 = vunpack.c.l.b16 %v743
    %v780 = vunpack.c.l.b16 %v744
    %v781 = vunpack.c.l.b16 %v745
    %v782 = vunpack.c.l.b16 %v746
    %v783 = vunpack.c.l.b16 %v747
    %v784 = vunpack.c.l.b16 %v748
    %v785 = vunpack.c.l.b16 %v749
    %v786 = vunpack.c.l.b16 %v750
    %v787 = vunpack.c.l.b16 %v751
    %v788 = vunpack.c.l.b16 %v752
    %v789 = vunpack.c.l.b16 %v753
    %v790 = vunpack.c.l.b16 %v754
    %v791 = vunpack.c.l.b16 %v755
    %v792 = vunpack.c.l.b16 %v756
    %v793 = vunpack.c.l.b16 %v757
    %v794 = vpack.c.b16 %v779, %v778
    %v795 = vpack.c.b16 %v781, %v780
    %v796 = vpack.c.b16 %v783, %v782
    %v797 = vpack.c.b16 %v785, %v784
    %v798 = vpack.c.b16 %v787, %v786
    %v799 = vpack.c.b16 %v789, %v788
    %v800 = vpack.c.b16 %v791, %v790
    %v801 = vpack.c.b16 %v793, %v792
    %810 = vmatpush.bf16.msra.mxu0 %v801
    %811 = vmatpush.bf16.msra.mxu0 %v800
    %812 = vmatpush.bf16.msra.mxu0 %v799
    %813 = vmatpush.bf16.msra.mxu0 %v798
    %814 = vmatpush.bf16.msra.mxu0 %v797
    %815 = vmatpush.bf16.msra.mxu0 %v796
    %816 = vmatpush.bf16.msra.mxu0 %v795
    %817 = vmatpush.bf16.msra.mxu0 %v794
    %818 = vmatmul.bf16.gmra.mxu0 %v741
    %v819 = vpop.f32.mrf.mxu0
    %v820 = vadd.f32 %v760, %v819
    %v821 = vpop.f32.mrf.mxu0
    %822 = vdwg.mxu0
    %823 = vst [vmem:[#allocation2] sm:$0x3] %v820
    // Predicated region
    $region46: #{barlowtwins_forward.1} parent=1 // pred_check
      _
    $region47: #{barlowtwins_forward.1} parent=1 // pred_check_branch
      %825 = sbr.rel (0) target = $region49
    $region48: #{barlowtwins_forward.1} parent=1 // pred_region
      %827 = vsyncadd [#allocation3], 0
      %s829 = sshll.u32 [#allocation2], 4
      %s830 = int_to_ptr.vmem [resolvable:$true] %s829
      %s831 = sshll.u32 %s11, 4
      %s832 = int_to_ptr.hbm [resolvable:$true] %s831
      %834 = dma.vmem_to_hbm [thread:$0]  %s830, 32, %s832, [#allocation3]
    $region49: #{barlowtwins_forward.1} parent=1 // pred_fallthru
      _
    // Predicated region
    $region50: #{barlowtwins_forward.1} parent=1 // pred_check
      _
    $region51: #{barlowtwins_forward.1} parent=1 // pred_check_branch
      %836 = sbr.rel (0) target = $region53
    $region52: #{barlowtwins_forward.1} parent=1 // pred_region
      %838 = dma.done [#allocation3], 32
    $region53: #{barlowtwins_forward.1} parent=1 // pred_fallthru
      _
    %839 = vsyncpa [#allocation3], 1

</llo_original>
